<compile_context>
chip_gen: v6e
topology: v6e:2x2x1
jax: 0.10.0
libtpu: 0.0.40
codegen_flags: <defaults>
</compile_context>

<pallas_src>
import functools

import jax
import jax.numpy as jnp
from jax.experimental import pallas as pl
from jax.experimental.pallas import tpu as pltpu


def _round_up(x, m):
    return (x + m - 1) // m * m


def _mlp_head_kernel(x_ref, w1_ref, b1_ref, w2_ref, b2_ref, o_ref, h_ref):
    # Grid = (i over M tiles ["parallel"], j over V tiles ["arbitrary"]).
    # h = relu(x @ W1 + b1) is computed once per M tile (at j == 0) and cached
    # in VMEM scratch; every j step then does only the (tm,H)x(H,tn) matmul.
    j = pl.program_id(1)

    @pl.when(j == 0)
    def _():
        h = jnp.dot(x_ref[...], w1_ref[...],
                    preferred_element_type=jnp.float32)   # (tm, H) f32 acc
        h = jnp.maximum(h + b1_ref[...], 0.0)              # bias + ReLU
        h_ref[...] = h.astype(h_ref.dtype)                 # cache in act dtype

    out = jnp.dot(h_ref[...], w2_ref[...],
                  preferred_element_type=jnp.float32)       # (tm, tn)
    o_ref[...] = (out + b2_ref[...]).astype(o_ref.dtype)


@functools.partial(jax.jit, static_argnames=("tm", "tn"))
def text_cls_head(x, w1, b1, w2, b2, *, tm=256, tn=512):
    """x: [B, S, H]; w1: [H, H]; b1: [1, H]; w2: [H, V]; b2: [1, V] -> [B, S, V]."""
    B, S, H = x.shape
    V = w2.shape[1]
    M = B * S
    dtype = x.dtype
    itemsize = jnp.dtype(dtype).itemsize
    sublane = {4: 8, 2: 16, 1: 32}.get(itemsize, 8)

    # Lane-dense padding for hidden and vocab dims.
    Hp = _round_up(H, 128)
    Vp = _round_up(V, 128)

    # Tile sizes: big M tile (capped to padded M), V tile a multiple of 128.
    tm_eff = min(_round_up(tm, sublane), _round_up(M, sublane))
    tn_eff = min(_round_up(tn, 128), Vp)

    x2d = x.reshape(M, H)
    w2p, b2p = w2, b2
    if Hp != H:
        x2d = jnp.pad(x2d, ((0, 0), (0, Hp - H)))
        w1 = jnp.pad(w1, ((0, Hp - H), (0, Hp - H)))
        b1 = jnp.pad(b1, ((0, 0), (0, Hp - H)))
        w2p = jnp.pad(w2p, ((0, Hp - H), (0, 0)))
    if Vp != V:
        w2p = jnp.pad(w2p, ((0, 0), (0, Vp - V)))
        b2p = jnp.pad(b2p, ((0, 0), (0, Vp - V)))

    grid = (pl.cdiv(M, tm_eff), pl.cdiv(Vp, tn_eff))

    # VMEM budget: BlockSpec double-buffers every input/output tile.
    vmem_bytes = (
        2 * tm_eff * Hp * itemsize        # x tiles
        + 2 * Hp * Hp * itemsize          # W1 (resident, still double-buffered)
        + 2 * 8 * Hp * itemsize           # b1 (sublane-padded)
        + 2 * Hp * tn_eff * itemsize      # W2 tiles (streamed over V)
        + 2 * 8 * tn_eff * itemsize       # b2
        + 2 * tm_eff * tn_eff * itemsize  # output tiles
        + tm_eff * Hp * itemsize          # h scratch
    )
    vmem_limit = int(min(max(2 * vmem_bytes, 32 * 1024 * 1024),
                         96 * 1024 * 1024))

    cost = pl.CostEstimate(
        flops=2 * M * Hp * (Hp + Vp),
        transcendentals=0,
        bytes_accessed=(M * Hp + Hp * Hp + grid[0] * Hp * Vp + M * Vp)
        * itemsize,
    )

    out2d = pl.pallas_call(
        _mlp_head_kernel,
        out_shape=jax.ShapeDtypeStruct((M, Vp), dtype),
        grid_spec=pltpu.PrefetchScalarGridSpec(
            num_scalar_prefetch=0,
            grid=grid,
            in_specs=[
                pl.BlockSpec((tm_eff, Hp), lambda i, j: (i, 0)),   # x tile
                pl.BlockSpec((Hp, Hp), lambda i, j: (0, 0)),       # W1 resident
                pl.BlockSpec((1, Hp), lambda i, j: (0, 0)),        # b1
                pl.BlockSpec((Hp, tn_eff), lambda i, j: (0, j)),   # W2 V-tile
                pl.BlockSpec((1, tn_eff), lambda i, j: (0, j)),    # b2 V-tile
            ],
            out_specs=pl.BlockSpec((tm_eff, tn_eff), lambda i, j: (i, j)),
            scratch_shapes=[pltpu.VMEM((tm_eff, Hp), dtype)],      # cached h
        ),
        compiler_params=pltpu.CompilerParams(
            dimension_semantics=("parallel", "arbitrary"),
            vmem_limit_bytes=vmem_limit,
        ),
        cost_estimate=cost,
    )(x2d, w1, b1, w2p, b2p)

    if Vp != V:
        out2d = out2d[:, :V]
    return out2d.reshape(B, S, V)


def init_params(key, input_size, voc_size, dtype=jnp.float32):
    """Deterministic init mimicking nn.Linear's uniform(-1/sqrt(fan_in), ...)."""
    k1, k2, k3, k4 = jax.random.split(key, 4)
    bound = 1.0 / (input_size ** 0.5)
    w1 = jax.random.uniform(k1, (input_size, input_size), dtype,
                            minval=-bound, maxval=bound)
    b1 = jax.random.uniform(k2, (1, input_size), dtype,
                            minval=-bound, maxval=bound)
    w2 = jax.random.uniform(k3, (input_size, voc_size), dtype,
                            minval=-bound, maxval=bound)
    b2 = jax.random.uniform(k4, (1, voc_size), dtype,
                            minval=-bound, maxval=bound)
    return w1, b1, w2, b2


def reference(x, w1, b1, w2, b2):
    h = jnp.maximum(x @ w1 + b1[0], 0.0)
    return h @ w2 + b2[0]


if __name__ == "__main__":
    key = jax.random.PRNGKey(0)
    kx, kp, kq = jax.random.split(key, 3)

    # Case 1: aligned shapes, single tile per axis (default large tiles).
    B, S, H, V = 2, 8, 128, 256
    x = jax.random.normal(kx, (B, S, H), dtype=jnp.float32)
    w1, b1, w2, b2 = init_params(kp, H, V)
    out = jax.block_until_ready(text_cls_head(x, w1, b1, w2, b2))
    ref = reference(x, w1, b1, w2, b2)
    assert out.shape == (B, S, V), out.shape
    assert jnp.allclose(out, ref, atol=1e-4, rtol=1e-4), "case1 mismatch"

    # Case 2: unaligned vocab (pads to 256) + small tiles so the grid has
    # multiple M and V steps, exercising the cached-h / streamed-W2 path.
    V2 = 200
    w1b, b1b, w2b, b2b = init_params(kq, H, V2)
    out2 = jax.block_until_ready(
        text_cls_head(x, w1b, b1b, w2b, b2b, tm=8, tn=128))
    ref2 = reference(x, w1b, b1b, w2b, b2b)
    assert out2.shape == (B, S, V2), out2.shape
    assert jnp.allclose(out2, ref2, atol=1e-4, rtol=1e-4), "case2 mismatch"

    print("KERNEL_OK")
</pallas_src>

<mosaic_0001>
module attributes {stable_mosaic.version = 11 : i64} {
  func.func @_mlp_head_kernel(%arg0: i32, %arg1: i32, %arg2: memref<16x128xf32, #tpu.memory_space<vmem>>, %arg3: memref<128x128xf32, #tpu.memory_space<vmem>>, %arg4: memref<1x128xf32, #tpu.memory_space<vmem>>, %arg5: memref<128x256xf32, #tpu.memory_space<vmem>>, %arg6: memref<1x256xf32, #tpu.memory_space<vmem>>, %arg7: memref<16x256xf32, #tpu.memory_space<vmem>>, %arg8: memref<16x128xf32, #tpu.memory_space<vmem>>) attributes {dimension_semantics = [#tpu.dimension_semantics<parallel>, #tpu.dimension_semantics<arbitrary>], iteration_bounds = array<i64: 1, 1>, scalar_prefetch = 0 : i64, scratch_operands = 1 : i64, tpu.core_type = #tpu.core_type<tc>, window_params = [{transform_indices = @transform_0, window_bounds = array<i64: 16, 128>}, {pipeline_mode = #tpu.pipeline_mode<synchronous>, transform_indices = @transform_1, window_bounds = array<i64: 128, 128>}, {pipeline_mode = #tpu.pipeline_mode<synchronous>, transform_indices = @transform_2, window_bounds = array<i64: 1, 128>}, {transform_indices = @transform_3, window_bounds = array<i64: 128, 256>}, {transform_indices = @transform_4, window_bounds = array<i64: 1, 256>}, {transform_indices = @transform_5, window_bounds = array<i64: 16, 256>}]} {
    %c0_i32 = arith.constant 0 : i32
    %0 = arith.cmpi eq, %arg1, %c0_i32 : i32
    %1 = arith.extui %0 : i1 to i32
    %c0_i32_0 = arith.constant 0 : i32
    %2 = arith.cmpi ne, %1, %c0_i32_0 : i32
    scf.if %2 {
      %c0_8 = arith.constant 0 : index
      %c0_9 = arith.constant 0 : index
      %10 = vector.load %arg2[%c0_8, %c0_9] : memref<16x128xf32, #tpu.memory_space<vmem>>, vector<16x128xf32>
      %c0_10 = arith.constant 0 : index
      %c0_11 = arith.constant 0 : index
      %11 = vector.load %arg3[%c0_10, %c0_11] : memref<128x128xf32, #tpu.memory_space<vmem>>, vector<128x128xf32>
      %cst_12 = arith.constant dense<0.000000e+00> : vector<16x128xf32>
      %12 = tpu.matmul %10, %11, %cst_12 {dimension_numbers = #tpu.dot_dimension_numbers<[1], [0], [0], [1], [0, 0, 1, 1], [], []>} : vector<16x128xf32>, vector<128x128xf32>, vector<16x128xf32> -> vector<16x128xf32>
      %c0_13 = arith.constant 0 : index
      %c0_14 = arith.constant 0 : index
      %13 = vector.load %arg4[%c0_13, %c0_14] : memref<1x128xf32, #tpu.memory_space<vmem>>, vector<1x128xf32>
      %14 = vector.broadcast %13 : vector<1x128xf32> to vector<16x128xf32>
      %15 = arith.addf %12, %14 : vector<16x128xf32>
      %cst_15 = arith.constant 0.000000e+00 : f32
      %16 = vector.broadcast %cst_15 : f32 to vector<16x128xf32>
      %17 = arith.maximumf %15, %16 : vector<16x128xf32>
      %c0_16 = arith.constant 0 : index
      %c0_17 = arith.constant 0 : index
      %18 = vector.load %arg8[%c0_16, %c0_17] : memref<16x128xf32, #tpu.memory_space<vmem>>, vector<16x128xf32>
      tpu.vector_store %arg8[%c0_16, %c0_17], %17 {strides = array<i32>} : memref<16x128xf32, #tpu.memory_space<vmem>>, vector<16x128xf32>,
    } else {
    }
    %c0 = arith.constant 0 : index
    %c0_1 = arith.constant 0 : index
    %3 = vector.load %arg8[%c0, %c0_1] : memref<16x128xf32, #tpu.memory_space<vmem>>, vector<16x128xf32>
    %c0_2 = arith.constant 0 : index
    %c0_3 = arith.constant 0 : index
    %4 = vector.load %arg5[%c0_2, %c0_3] : memref<128x256xf32, #tpu.memory_space<vmem>>, vector<128x256xf32>
    %cst = arith.constant dense<0.000000e+00> : vector<16x256xf32>
    %5 = tpu.matmul %3, %4, %cst {dimension_numbers = #tpu.dot_dimension_numbers<[1], [0], [0], [1], [0, 0, 1, 1], [], []>} : vector<16x128xf32>, vector<128x256xf32>, vector<16x256xf32> -> vector<16x256xf32>
    %c0_4 = arith.constant 0 : index
    %c0_5 = arith.constant 0 : index
    %6 = vector.load %arg6[%c0_4, %c0_5] : memref<1x256xf32, #tpu.memory_space<vmem>>, vector<1x256xf32>
    %7 = vector.broadcast %6 : vector<1x256xf32> to vector<16x256xf32>
    %8 = arith.addf %5, %7 : vector<16x256xf32>
    %c0_6 = arith.constant 0 : index
    %c0_7 = arith.constant 0 : index
    %9 = vector.load %arg7[%c0_6, %c0_7] : memref<16x256xf32, #tpu.memory_space<vmem>>, vector<16x256xf32>
    tpu.vector_store %arg7[%c0_6, %c0_7], %8 {strides = array<i32>} : memref<16x256xf32, #tpu.memory_space<vmem>>, vector<16x256xf32>,
    return
  }
  func.func @transform_0(%arg0: i32, %arg1: i32) -> (i32, i32) {
    %c0_i32 = arith.constant 0 : i32
    %c0_i32_0 = arith.constant 0 : i32
    return %arg0, %c0_i32 : i32, i32
  }
  func.func @transform_1(%arg0: i32, %arg1: i32) -> (i32, i32) {
    %c0_i32 = arith.constant 0 : i32
    %c0_i32_0 = arith.constant 0 : i32
    %c0_i32_1 = arith.constant 0 : i32
    return %c0_i32, %c0_i32_0 : i32, i32
  }
  func.func @transform_2(%arg0: i32, %arg1: i32) -> (i32, i32) {
    %c0_i32 = arith.constant 0 : i32
    %c0_i32_0 = arith.constant 0 : i32
    %c0_i32_1 = arith.constant 0 : i32
    return %c0_i32, %c0_i32_0 : i32, i32
  }
  func.func @transform_3(%arg0: i32, %arg1: i32) -> (i32, i32) {
    %c0_i32 = arith.constant 0 : i32
    %c0_i32_0 = arith.constant 0 : i32
    return %c0_i32, %arg1 : i32, i32
  }
  func.func @transform_4(%arg0: i32, %arg1: i32) -> (i32, i32) {
    %c0_i32 = arith.constant 0 : i32
    %c0_i32_0 = arith.constant 0 : i32
    return %c0_i32, %arg1 : i32, i32
  }
  func.func @transform_5(%arg0: i32, %arg1: i32) -> (i32, i32) {
    %c0_i32 = arith.constant 0 : i32
    return %arg0, %arg1 : i32, i32
  }
}

</mosaic_0001>

<llo_original>
// kernel: text_cls_head.1
$region0: #{text_cls_head.1}
  #allocation0 [shape = 'u32[]', space=smem, size = 0x4, offset = 0x4, fixed_abs, tag = 'smem constant byte address 0x4 - core index']
  #allocation1 [shape = 'u32[144,128]{1,0:T(1,128)}', space=vmem, size = 0x12000, scoped, tag = 'internal scratch']
  #allocation2 [shape = 'f32[16,128]{1,0:T(8,128)}', space=vmem, size = 0x2000, scoped, tag = 'scratch operand']
  %s0 = inlined_call_operand.hbm [shape: f32[16,128], index: 0, kind: input, shape index: {}]
  %s1 = inlined_call_operand.hbm [shape: f32[128,128], index: 1, kind: input, shape index: {}]
  %s2 = inlined_call_operand.vmem [shape: f32[1,128], index: 2, kind: input, shape index: {}]
  %s3 = inlined_call_operand.hbm [shape: f32[128,256], index: 3, kind: input, shape index: {}]
  %s4 = inlined_call_operand.vmem [shape: f32[1,256], index: 4, kind: input, shape index: {}]
  %s5 = inlined_call_operand.hbm [shape: f32[16,256], index: 5, kind: output, shape index: {}]
  %s6 = sld [smem:[#allocation0]]
  $region46: #{text_cls_head.1} parent=0
    _
  %s8 = ssub.s32 1, %s6
  %s9 = scalar_select 0, %s8, %s6
  $region1: #{text_cls_head.1} parent=0
    #allocation3 [shape = 'u8[8192]{0}', space=vmem, size = 0x2000, scoped, tag = 'input window, operand 0, single buffered']
    #allocation4 [shape = 's32[1]{0}', space=sflag, size = 0x4, scoped, tag = 'scoped memory for text_cls_head.1']
    #allocation5 [shape = 's32[1]{0}', space=sflag, size = 0x4, scoped, tag = 'scoped memory for text_cls_head.1']
    #allocation6 [shape = 'u8[65536]{0}', space=vmem, size = 0x10000, scoped, tag = 'input window, operand 1, single buffered']
    #allocation7 [shape = 's32[1]{0}', space=sflag, size = 0x4, scoped, tag = 'scoped memory for text_cls_head.1']
    #allocation8 [shape = 'u8[131072]{0}', space=vmem, size = 0x20000, scoped, tag = 'input window, operand 3, single buffered']
    #allocation9 [shape = 'u8[16384]{0}', space=vmem, size = 0x4000, scoped, tag = 'output window, operand 0, single buffered']
    %10 = vsyncpa [#allocation4], 0
    %11 = vsyncpa [#allocation7], 0
    %12 = vsyncpa [#allocation5], 0
    // Predicated region
    $region2: #{text_cls_head.1} parent=1 // pred_check
      _
    $region3: #{text_cls_head.1} parent=1 // pred_check_branch
      %14 = sbr.rel (0) target = $region5
    $region4: #{text_cls_head.1} parent=1 // pred_region
      %s16 = ssub.s32 256, 256
      %17 = vsyncadd [#allocation4], %s16
      %s18 = sshll.u32 [#allocation3], 4
      %s19 = int_to_ptr.vmem [resolvable:$true] %s18
      %24 = dma.hbm_to_vmem [thread:$0]  %s0, 256, %s19, [#allocation4], 128, 128, 8
    $region5: #{text_cls_head.1} parent=1 // pred_fallthru
      _
    // Predicated region
    $region6: #{text_cls_head.1} parent=1 // pred_check
      _
    $region7: #{text_cls_head.1} parent=1 // pred_check_branch
      %26 = sbr.rel (0) target = $region9
    $region8: #{text_cls_head.1} parent=1 // pred_region
      %s28 = ssub.s32 2048, 2048
      %29 = vsyncadd [#allocation7], %s28
      %s30 = sshll.u32 [#allocation6], 4
      %s31 = int_to_ptr.vmem [resolvable:$true] %s30
      %36 = dma.hbm_to_vmem [thread:$0]  %s1, 2048, %s31, [#allocation7], 128, 128, 8
    $region9: #{text_cls_head.1} parent=1 // pred_fallthru
      _
    // Predicated region
    $region10: #{text_cls_head.1} parent=1 // pred_check
      _
    $region11: #{text_cls_head.1} parent=1 // pred_check_branch
      %38 = sbr.rel (0) target = $region13
    $region12: #{text_cls_head.1} parent=1 // pred_region
      _
    $region13: #{text_cls_head.1} parent=1 // pred_fallthru
      _
    // Predicated region
    $region14: #{text_cls_head.1} parent=1 // pred_check
      _
    $region15: #{text_cls_head.1} parent=1 // pred_check_branch
      %40 = sbr.rel (0) target = $region17
    $region16: #{text_cls_head.1} parent=1 // pred_region
      %s42 = ssub.s32 4096, 4096
      %43 = vsyncadd [#allocation7], %s42
      %s44 = sshll.u32 [#allocation8], 4
      %s45 = int_to_ptr.vmem [resolvable:$true] %s44
      %50 = dma.hbm_to_vmem [thread:$0]  %s3, 4096, %s45, [#allocation7], 256, 256, 16
    $region17: #{text_cls_head.1} parent=1 // pred_fallthru
      _
    // Predicated region
    $region18: #{text_cls_head.1} parent=1 // pred_check
      _
    $region19: #{text_cls_head.1} parent=1 // pred_check_branch
      %52 = sbr.rel (0) target = $region21
    $region20: #{text_cls_head.1} parent=1 // pred_region
      _
    $region21: #{text_cls_head.1} parent=1 // pred_fallthru
      _
    // Predicated region
    $region22: #{text_cls_head.1} parent=1 // pred_check
      _
    $region23: #{text_cls_head.1} parent=1 // pred_check_branch
      %54 = sbr.rel (0) target = $region25
    $region24: #{text_cls_head.1} parent=1 // pred_region
      %55 = dma.done [#allocation4], 256
    $region25: #{text_cls_head.1} parent=1 // pred_fallthru
      _
    // Predicated region
    $region26: #{text_cls_head.1} parent=1 // pred_check
      _
    $region27: #{text_cls_head.1} parent=1 // pred_check_branch
      %57 = sbr.rel (0) target = $region29
    $region28: #{text_cls_head.1} parent=1 // pred_region
      %58 = dma.done [#allocation7], 2048
    $region29: #{text_cls_head.1} parent=1 // pred_fallthru
      _
    // Predicated region
    $region30: #{text_cls_head.1} parent=1 // pred_check
      _
    $region31: #{text_cls_head.1} parent=1 // pred_check_branch
      %60 = sbr.rel (0) target = $region33
    $region32: #{text_cls_head.1} parent=1 // pred_region
      %61 = dma.done [#allocation7], 4096
    $region33: #{text_cls_head.1} parent=1 // pred_fallthru
      _
    %p62 = scmp.eq.s32.totalorder 0, 0
    // Predicated region
    $region34: #{text_cls_head.1} parent=1 // pred_check
      %p63 = pneg %p62
    $region35: #{text_cls_head.1} parent=1 // pred_check_branch
      %65 = sbr.rel (%p63) target = $region37
    $region36: #{text_cls_head.1} parent=1 // pred_region
      %v66 = vld [vmem:[#allocation3] sm:$0xff]
      %v67 = vld [vmem:[#allocation3 + $0x8] sm:$0xff]
      %v68 = vld [vmem:[#allocation6] sm:$0xff]
      %v69 = vld [vmem:[#allocation6 + $0x8] sm:$0xff]
      %v70 = vld [vmem:[#allocation6 + $0x10] sm:$0xff]
      %v71 = vld [vmem:[#allocation6 + $0x18] sm:$0xff]
      %v72 = vld [vmem:[#allocation6 + $0x20] sm:$0xff]
      %v73 = vld [vmem:[#allocation6 + $0x28] sm:$0xff]
      %v74 = vld [vmem:[#allocation6 + $0x30] sm:$0xff]
      %v75 = vld [vmem:[#allocation6 + $0x38] sm:$0xff]
      %v76 = vld [vmem:[#allocation6 + $0x40] sm:$0xff]
      %v77 = vld [vmem:[#allocation6 + $0x48] sm:$0xff]
      %v78 = vld [vmem:[#allocation6 + $0x50] sm:$0xff]
      %v79 = vld [vmem:[#allocation6 + $0x58] sm:$0xff]
      %v80 = vld [vmem:[#allocation6 + $0x60] sm:$0xff]
      %v81 = vld [vmem:[#allocation6 + $0x68] sm:$0xff]
      %v82 = vld [vmem:[#allocation6 + $0x70] sm:$0xff]
      %v83 = vld [vmem:[#allocation6 + $0x78] sm:$0xff]
      %v84 = vld [vmem:[%s2] sm:$0x1]
      %v86 = vlaneseq
      %v87 = vshrl.u32 %v86, 7
      %v88 = vsub.s32 0, %v87
      %v89 = vrot.slane %v84, %v88
      %91 = vmatprep.subr.mxu0 0.0
      %92 = vmatpush1.msra.mxu0 %v83
      %93 = vmatprep.subr.mxu0 0.0
      %94 = vmatpush1.msra.mxu0 %v82
      %95 = vmatprep.subr.mxu0 0.0
      %96 = vmatpush1.msra.mxu0 %v81
      %97 = vmatprep.subr.mxu0 0.0
      %98 = vmatpush1.msra.mxu0 %v80
      %99 = vmatprep.subr.mxu0 0.0
      %100 = vmatpush1.msra.mxu0 %v79
      %101 = vmatprep.subr.mxu0 0.0
      %102 = vmatpush1.msra.mxu0 %v78
      %103 = vmatprep.subr.mxu0 0.0
      %104 = vmatpush1.msra.mxu0 %v77
      %105 = vmatprep.subr.mxu0 0.0
      %106 = vmatpush1.msra.mxu0 %v76
      %107 = vmatprep.subr.mxu0 0.0
      %108 = vmatpush1.msra.mxu0 %v75
      %109 = vmatprep.subr.mxu0 0.0
      %110 = vmatpush1.msra.mxu0 %v74
      %111 = vmatprep.subr.mxu0 0.0
      %112 = vmatpush1.msra.mxu0 %v73
      %113 = vmatprep.subr.mxu0 0.0
      %114 = vmatpush1.msra.mxu0 %v72
      %115 = vmatprep.subr.mxu0 0.0
      %116 = vmatpush1.msra.mxu0 %v71
      %117 = vmatprep.subr.mxu0 0.0
      %118 = vmatpush1.msra.mxu0 %v70
      %119 = vmatprep.subr.mxu0 0.0
      %120 = vmatpush1.msra.mxu0 %v69
      %121 = vmatprep.subr.mxu0 0.0
      %122 = vmatpush1.msra.mxu0 %v68
      %123 = vmatprep.subr.mxu0 0.0
      %124 = vmatpush2.msra.mxu0 0.0
      %125 = vmatprep.subr.mxu0 0.0
      %126 = vmatpush2.msra.mxu0 0.0
      %127 = vmatprep.subr.mxu0 0.0
      %128 = vmatpush2.msra.mxu0 0.0
      %129 = vmatprep.subr.mxu0 0.0
      %130 = vmatpush2.msra.mxu0 0.0
      %131 = vmatprep.subr.mxu0 0.0
      %132 = vmatpush2.msra.mxu0 0.0
      %133 = vmatprep.subr.mxu0 0.0
      %134 = vmatpush2.msra.mxu0 0.0
      %135 = vmatprep.subr.mxu0 0.0
      %136 = vmatpush2.msra.mxu0 0.0
      %137 = vmatprep.subr.mxu0 0.0
      %138 = vmatpush2.msra.mxu0 0.0
      %139 = vmatprep.subr.mxu0 0.0
      %140 = vmatpush2.msra.mxu0 0.0
      %141 = vmatprep.subr.mxu0 0.0
      %142 = vmatpush2.msra.mxu0 0.0
      %143 = vmatprep.subr.mxu0 0.0
      %144 = vmatpush2.msra.mxu0 0.0
      %145 = vmatprep.subr.mxu0 0.0
      %146 = vmatpush2.msra.mxu0 0.0
      %147 = vmatprep.subr.mxu0 0.0
      %148 = vmatpush2.msra.mxu0 0.0
      %149 = vmatprep.subr.mxu0 0.0
      %150 = vmatpush2.msra.mxu0 0.0
      %151 = vmatprep.subr.mxu0 0.0
      %152 = vmatpush2.msra.mxu0 0.0
      %153 = vmatprep.subr.mxu0 0.0
      %154 = vmatpush2.msra.mxu0 0.0
      %155 = vmatprep.mubr.f32.mxu0 0.0
      %156 = vmatmul.mubr.f32.gmra.mxu0 %v66
      %v157 = vpop.f32.mrf.mxu0
      %v158 = vadd.f32 %v89, %v157
      %v159 = vpop.f32.mrf.mxu0
      %160 = vmatprep.mubr.f32.mxu0 0.0
      %161 = vmatmul.mubr.f32.gmra.mxu0 %v67
      %v162 = vpop.f32.mrf.mxu0
      %v163 = vadd.f32 %v89, %v162
      %v164 = vpop.f32.mrf.mxu0
      %165 = vdwg.mxu0
      %v166 = vmax.f32 %v158, 0.0
      %v167 = vmax.f32 %v163, 0.0
      %168 = vst [vmem:[#allocation2] sm:$0xff] %v166
      %169 = vst [vmem:[#allocation2 + $0x8] sm:$0xff] %v167
    $region37: #{text_cls_head.1} parent=1 // pred_fallthru
      _
    %v170 = vld [vmem:[#allocation2] sm:$0xff]
    %v171 = vld [vmem:[#allocation2 + $0x8] sm:$0xff]
    %v172 = vld [vmem:[#allocation8] sm:$0xff]
    %v173 = vld [vmem:[#allocation8 + $0x8] sm:$0xff]
    %v174 = vld [vmem:[#allocation8 + $0x10] sm:$0xff]
    %v175 = vld [vmem:[#allocation8 + $0x18] sm:$0xff]
    %v176 = vld [vmem:[#allocation8 + $0x20] sm:$0xff]
    %v177 = vld [vmem:[#allocation8 + $0x28] sm:$0xff]
    %v178 = vld [vmem:[#allocation8 + $0x30] sm:$0xff]
    %v179 = vld [vmem:[#allocation8 + $0x38] sm:$0xff]
    %v180 = vld [vmem:[#allocation8 + $0x40] sm:$0xff]
    %v181 = vld [vmem:[#allocation8 + $0x48] sm:$0xff]
    %v182 = vld [vmem:[#allocation8 + $0x50] sm:$0xff]
    %v183 = vld [vmem:[#allocation8 + $0x58] sm:$0xff]
    %v184 = vld [vmem:[#allocation8 + $0x60] sm:$0xff]
    %v185 = vld [vmem:[#allocation8 + $0x68] sm:$0xff]
    %v186 = vld [vmem:[#allocation8 + $0x70] sm:$0xff]
    %v187 = vld [vmem:[#allocation8 + $0x78] sm:$0xff]
    %v188 = vld [vmem:[#allocation8 + $0x80] sm:$0xff]
    %v189 = vld [vmem:[#allocation8 + $0x88] sm:$0xff]
    %v190 = vld [vmem:[#allocation8 + $0x90] sm:$0xff]
    %v191 = vld [vmem:[#allocation8 + $0x98] sm:$0xff]
    %v192 = vld [vmem:[#allocation8 + $0xa0] sm:$0xff]
    %v193 = vld [vmem:[#allocation8 + $0xa8] sm:$0xff]
    %v194 = vld [vmem:[#allocation8 + $0xb0] sm:$0xff]
    %v195 = vld [vmem:[#allocation8 + $0xb8] sm:$0xff]
    %v196 = vld [vmem:[#allocation8 + $0xc0] sm:$0xff]
    %v197 = vld [vmem:[#allocation8 + $0xc8] sm:$0xff]
    %v198 = vld [vmem:[#allocation8 + $0xd0] sm:$0xff]
    %v199 = vld [vmem:[#allocation8 + $0xd8] sm:$0xff]
    %v200 = vld [vmem:[#allocation8 + $0xe0] sm:$0xff]
    %v201 = vld [vmem:[#allocation8 + $0xe8] sm:$0xff]
    %v202 = vld [vmem:[#allocation8 + $0xf0] sm:$0xff]
    %v203 = vld [vmem:[#allocation8 + $0xf8] sm:$0xff]
    %v204 = vld [vmem:[%s4] sm:$0x3]
    %v206 = vlaneseq
    %v207 = vshrl.u32 %v206, 7
    %v208 = vsub.s32 0, %v207
    %v209 = vrot.slane %v204, %v208
    %v210 = vlaneseq
    %v211 = vshrl.u32 %v210, 7
    %v212 = vsub.s32 1, %v211
    %v213 = vrot.slane %v204, %v212
    %216 = vmatprep.subr.mxu0 %v203
    %217 = vmatpush1.msra.mxu0 %v202
    %218 = vmatprep.subr.mxu0 %v201
    %219 = vmatpush1.msra.mxu0 %v200
    %220 = vmatprep.subr.mxu0 %v199
    %221 = vmatpush1.msra.mxu0 %v198
    %222 = vmatprep.subr.mxu0 %v197
    %223 = vmatpush1.msra.mxu0 %v196
    %224 = vmatprep.subr.mxu0 %v195
    %225 = vmatpush1.msra.mxu0 %v194
    %226 = vmatprep.subr.mxu0 %v193
    %227 = vmatpush1.msra.mxu0 %v192
    %228 = vmatprep.subr.mxu0 %v191
    %229 = vmatpush1.msra.mxu0 %v190
    %230 = vmatprep.subr.mxu0 %v189
    %231 = vmatpush1.msra.mxu0 %v188
    %232 = vmatprep.subr.mxu0 %v187
    %233 = vmatpush1.msra.mxu0 %v186
    %234 = vmatprep.subr.mxu0 %v185
    %235 = vmatpush1.msra.mxu0 %v184
    %236 = vmatprep.subr.mxu0 %v183
    %237 = vmatpush1.msra.mxu0 %v182
    %238 = vmatprep.subr.mxu0 %v181
    %239 = vmatpush1.msra.mxu0 %v180
    %240 = vmatprep.subr.mxu0 %v179
    %241 = vmatpush1.msra.mxu0 %v178
    %242 = vmatprep.subr.mxu0 %v177
    %243 = vmatpush1.msra.mxu0 %v176
    %244 = vmatprep.subr.mxu0 %v175
    %245 = vmatpush1.msra.mxu0 %v174
    %246 = vmatprep.subr.mxu0 %v173
    %247 = vmatpush1.msra.mxu0 %v172
    %248 = vmatprep.subr.mxu0 0.0
    %249 = vmatpush2.msra.mxu0 0.0
    %250 = vmatprep.subr.mxu0 0.0
    %251 = vmatpush2.msra.mxu0 0.0
    %252 = vmatprep.subr.mxu0 0.0
    %253 = vmatpush2.msra.mxu0 0.0
    %254 = vmatprep.subr.mxu0 0.0
    %255 = vmatpush2.msra.mxu0 0.0
    %256 = vmatprep.subr.mxu0 0.0
    %257 = vmatpush2.msra.mxu0 0.0
    %258 = vmatprep.subr.mxu0 0.0
    %259 = vmatpush2.msra.mxu0 0.0
    %260 = vmatprep.subr.mxu0 0.0
    %261 = vmatpush2.msra.mxu0 0.0
    %262 = vmatprep.subr.mxu0 0.0
    %263 = vmatpush2.msra.mxu0 0.0
    %264 = vmatprep.subr.mxu0 0.0
    %265 = vmatpush2.msra.mxu0 0.0
    %266 = vmatprep.subr.mxu0 0.0
    %267 = vmatpush2.msra.mxu0 0.0
    %268 = vmatprep.subr.mxu0 0.0
    %269 = vmatpush2.msra.mxu0 0.0
    %270 = vmatprep.subr.mxu0 0.0
    %271 = vmatpush2.msra.mxu0 0.0
    %272 = vmatprep.subr.mxu0 0.0
    %273 = vmatpush2.msra.mxu0 0.0
    %274 = vmatprep.subr.mxu0 0.0
    %275 = vmatpush2.msra.mxu0 0.0
    %276 = vmatprep.subr.mxu0 0.0
    %277 = vmatpush2.msra.mxu0 0.0
    %278 = vmatprep.subr.mxu0 0.0
    %279 = vmatpush2.msra.mxu0 0.0
    %280 = vmatprep.mubr.f32.mxu0 0.0
    %281 = vmatmul.mubr.f32.gmra.mxu0 %v170
    %v282 = vpop.f32.mrf.mxu0
    %v283 = vadd.f32 %v209, %v282
    %v284 = vpop.f32.mrf.mxu0
    %v285 = vadd.f32 %v213, %v284
    %286 = vmatprep.mubr.f32.mxu0 0.0
    %287 = vmatmul.mubr.f32.gmra.mxu0 %v171
    %v288 = vpop.f32.mrf.mxu0
    %v289 = vadd.f32 %v209, %v288
    %v290 = vpop.f32.mrf.mxu0
    %v291 = vadd.f32 %v213, %v290
    %292 = vdwg.mxu0
    %293 = vst [vmem:[#allocation9] sm:$0xff] %v283
    %294 = vst [vmem:[#allocation9 + $0x8] sm:$0xff] %v285
    %295 = vst [vmem:[#allocation9 + $0x10] sm:$0xff] %v289
    %296 = vst [vmem:[#allocation9 + $0x18] sm:$0xff] %v291
    // Predicated region
    $region38: #{text_cls_head.1} parent=1 // pred_check
      _
    $region39: #{text_cls_head.1} parent=1 // pred_check_branch
      %298 = sbr.rel (0) target = $region41
    $region40: #{text_cls_head.1} parent=1 // pred_region
      %s300 = ssub.s32 512, 512
      %301 = vsyncadd [#allocation5], %s300
      %s302 = sshll.u32 [#allocation9], 4
      %s303 = int_to_ptr.vmem [resolvable:$true] %s302
      %308 = dma.vmem_to_hbm [thread:$0]  %s303, 512, %s5, [#allocation5], 256, 256, 16
    $region41: #{text_cls_head.1} parent=1 // pred_fallthru
      _
    // Predicated region
    $region42: #{text_cls_head.1} parent=1 // pred_check
      _
    $region43: #{text_cls_head.1} parent=1 // pred_check_branch
      %310 = sbr.rel (0) target = $region45
    $region44: #{text_cls_head.1} parent=1 // pred_region
      %311 = dma.done [#allocation5], 512
    $region45: #{text_cls_head.1} parent=1 // pred_fallthru
      _
    %312 = vsyncpa [#allocation4], 1
    %313 = vsyncpa [#allocation7], 1
    %314 = vsyncpa [#allocation5], 1

</llo_original>
